<compile_context>
chip_gen: v5e
topology: v5e:2x2
jax: 0.10.0
libtpu: 0.0.40
codegen_flags: <defaults>
</compile_context>

<pallas_src>
import jax
import jax.numpy as jnp
from jax.experimental import pallas as pl
from jax.experimental.pallas import tpu as pltpu

_MIB = 1024 * 1024


def _tanh_gate_kernel(gate_ref, x_ref, o_ref):
    # gate_ref: SMEM (1,) f32 holding tanh(scale); x_ref / o_ref: VMEM (TR, C) tiles.
    # Multiply in f32, round once into the output dtype (matches the PyTorch reference).
    o_ref[...] = (x_ref[...].astype(jnp.float32) * gate_ref[0]).astype(o_ref.dtype)


def _tpu_vmem_capacity_bytes():
    try:
        cap = getattr(pltpu.get_tpu_info(), "vmem_capacity_bytes", None)
        return int(cap) if cap else None
    except Exception:
        return None


def _choose_lane_width(n: int, max_lanes: int = 4096) -> int:
    """Largest power-of-two multiple of 128 (<= max_lanes) dividing n (n % 128 == 0)."""
    c = 128
    while c * 2 <= max_lanes and n % (c * 2) == 0:
        c *= 2
    return c


def _row_tile(rows: int, row_bytes: int, sub: int, target_block_bytes: int):
    """Pick (row_tile, grid_steps) for a (rows, C) slab."""
    total_bytes = rows * row_bytes
    # Tiny tensors: a single block covering everything (block dims == full dims is legal).
    if total_bytes <= 2 * _MIB or rows <= sub:
        return rows, 1
    # Largest sublane-aligned tile under the per-block byte target ...
    tr_cap = max(sub, (target_block_bytes // row_bytes) // sub * sub)
    # ... but never fewer than ~4 grid steps: keeps in/out DMA double-buffering busy
    # and gives v7x's two TensorCores work to split.
    tr = min(tr_cap, max(sub, (pl.cdiv(rows, 4) // sub) * sub))
    tr = min(tr, rows)
    grid = pl.cdiv(rows, tr)
    # Prefer an even step count (balanced across v7x's 2 TCs) when it is free.
    if grid > 1 and grid % 2 == 1:
        tr_even = min(rows, max(sub, -(-pl.cdiv(rows, grid + 1) // sub) * sub))
        grid_even = pl.cdiv(rows, tr_even)
        if grid_even % 2 == 0:
            tr, grid = tr_even, grid_even
    return tr, grid


def tanh_gate(x: jax.Array, scale: jax.Array, *,
              target_block_bytes: int | None = None,
              vmem_limit_bytes: int | None = None) -> jax.Array:
    """TanhGate forward: x * tanh(scale). x: any shape; scale: (1,) learnable scalar."""
    # TODO(synk): in a full model, fuse this gate into the producing elementwise op
    # (or emit plain x * jnp.tanh(scale) so XLA fuses it); a standalone HBM-streaming
    # kernel cannot beat fused XLA — this kernel only targets the roofline in isolation.
    orig_shape = x.shape
    n = x.size
    if n == 0:
        return x
    itemsize = jnp.dtype(x.dtype).itemsize
    sub = max(8, 32 // itemsize)  # packed sublane multiple: 8 f32 / 16 bf16 / 32 int8

    # Gate computed once, in f32, outside the kernel (tiny scalar op; rounds only the product).
    gate = jnp.tanh(scale.reshape((1,)).astype(jnp.float32))

    # ---- lane-dense 2D view of x, no pad / slice HBM round trips -------------------
    if n % 128 == 0:
        c = _choose_lane_width(n)                    # multiple of 128 -> unmasked vst
    else:
        c = orig_shape[-1] if x.ndim >= 2 else n     # block lane dim == full dim: legal
    rows = n // c
    x2d = x.reshape(rows, c)
    row_bytes = c * itemsize

    vmem_cap = _tpu_vmem_capacity_bytes()
    if target_block_bytes is None:
        # ~10-12 MiB blocks: 4 live buffers (in + out, double-buffered) stay well under
        # v7x's 64 MiB physical VMEM while amortizing the ~0.35 us per-step overhead.
        target_block_bytes = min(12 * _MIB, max(4 * _MIB, (vmem_cap or 64 * _MIB) // 6))

    tr, grid = _row_tile(rows, row_bytes, sub, target_block_bytes)
    block_bytes = tr * row_bytes
    if vmem_limit_bytes is None:
        # Size the scoped-VMEM limit from the actual footprint (+ margin), capped below
        # physical capacity; never rely on the 16/32 MiB defaults (v5e would OOM).
        hard_cap = (vmem_cap or 64 * _MIB) - 2 * _MIB
        vmem_limit_bytes = max(16 * _MIB, min(4 * block_bytes + 4 * _MIB, hard_cap))

    out2d = pl.pallas_call(
        _tanh_gate_kernel,
        out_shape=jax.ShapeDtypeStruct((rows, c), x.dtype),
        grid_spec=pltpu.PrefetchScalarGridSpec(
            num_scalar_prefetch=1,                   # gate -> SMEM once, before the grid
            grid=(grid,),
            in_specs=[pl.BlockSpec((tr, c), lambda i, g: (i, 0))],
            out_specs=pl.BlockSpec((tr, c), lambda i, g: (i, 0)),
        ),
        compiler_params=pltpu.CompilerParams(
            dimension_semantics=("parallel",),
            vmem_limit_bytes=int(vmem_limit_bytes),
        ),
    )(gate, x2d)

    return out2d.reshape(orig_shape)


if __name__ == "__main__":
    key = jax.random.PRNGKey(0)
    k0, k1, k2, k3 = jax.random.split(key, 4)

    def ref_fn(x, s):
        return (x.astype(jnp.float32) * jnp.tanh(s.astype(jnp.float32)[0])).astype(x.dtype)

    scale_zero = jnp.zeros((1,), dtype=jnp.float32)     # nn.Parameter(torch.zeros(1))
    scale = jnp.array([0.5], dtype=jnp.float32)

    # --- small shape consistent with the module (batch=2, seq=8, hidden=32) ---------
    x = jax.random.normal(k0, (2, 8, 32), dtype=jnp.float32)
    out_zero = jax.block_until_ready(tanh_gate(x, scale_zero))
    assert jnp.allclose(out_zero, jnp.zeros_like(x)), "zero-init gate mismatch"
    out = jax.block_until_ready(tanh_gate(x, scale))
    assert jnp.allclose(out, ref_fn(x, scale), atol=1e-6, rtol=1e-6), "tanh gate mismatch"

    # --- exercise the multi-step, row-tiled grid (small block budget) ---------------
    x_big = jax.random.normal(k1, (4, 288, 512), dtype=jnp.float32)   # > 2 MiB -> tiled
    out_big = jax.block_until_ready(tanh_gate(x_big, scale, target_block_bytes=128 * 1024))
    assert jnp.allclose(out_big, ref_fn(x_big, scale), atol=1e-6, rtol=1e-6), "tiled mismatch"

    # --- non-multiple-of-128 trailing dim: no pad/slice, full-extent lane block -----
    x_odd = jax.random.normal(k2, (3, 5, 33), dtype=jnp.float32)
    out_odd = jax.block_until_ready(tanh_gate(x_odd, scale))
    assert jnp.allclose(out_odd, ref_fn(x_odd, scale), atol=1e-6, rtol=1e-6), "odd-shape mismatch"

    # --- bf16 activations (torchtune default): f32 gate, single rounding of product -
    x_bf16 = jax.random.normal(k3, (2, 16, 256), dtype=jnp.bfloat16)
    out_bf16 = jax.block_until_ready(tanh_gate(x_bf16, scale))
    assert jnp.allclose(out_bf16.astype(jnp.float32),
                        ref_fn(x_bf16, scale).astype(jnp.float32)), "bf16 mismatch"

    print("KERNEL_OK")
</pallas_src>

<mosaic_0001>
module attributes {stable_mosaic.version = 11 : i64} {
  func.func @_tanh_gate_kernel(%arg0: i32, %arg1: memref<1xf32, #tpu.memory_space<smem>>, %arg2: memref<1x512xf32, #tpu.memory_space<vmem>>, %arg3: memref<1x512xf32, #tpu.memory_space<vmem>>) attributes {dimension_semantics = [#tpu.dimension_semantics<parallel>], iteration_bounds = array<i64: 1>, scalar_prefetch = 1 : i64, scratch_operands = 0 : i64, tpu.core_type = #tpu.core_type<tc>, window_params = [{transform_indices = @transform_0, window_bounds = array<i64: 1, 512>}, {transform_indices = @transform_1, window_bounds = array<i64: 1, 512>}]} {
    %c0 = arith.constant 0 : index
    %c0_0 = arith.constant 0 : index
    %0 = vector.load %arg2[%c0, %c0_0] : memref<1x512xf32, #tpu.memory_space<vmem>>, vector<1x512xf32>
    %c0_1 = arith.constant 0 : index
    %1 = memref.load %arg1[%c0_1] : memref<1xf32, #tpu.memory_space<smem>>
    %2 = vector.broadcast %1 : f32 to vector<1x512xf32>
    %3 = arith.mulf %0, %2 : vector<1x512xf32>
    %c0_2 = arith.constant 0 : index
    %c0_3 = arith.constant 0 : index
    %4 = vector.load %arg3[%c0_2, %c0_3] : memref<1x512xf32, #tpu.memory_space<vmem>>, vector<1x512xf32>
    tpu.vector_store %arg3[%c0_2, %c0_3], %3 {strides = array<i32>} : memref<1x512xf32, #tpu.memory_space<vmem>>, vector<1x512xf32>,
    return
  }
  func.func @transform_0(%arg0: i32, %arg1: memref<1xf32, #tpu.memory_space<smem>>) -> (i32, i32) {
    %c0_i32 = arith.constant 0 : i32
    %c0_i32_0 = arith.constant 0 : i32
    return %arg0, %c0_i32 : i32, i32
  }
  func.func @transform_1(%arg0: i32, %arg1: memref<1xf32, #tpu.memory_space<smem>>) -> (i32, i32) {
    %c0_i32 = arith.constant 0 : i32
    %c0_i32_0 = arith.constant 0 : i32
    return %arg0, %c0_i32 : i32, i32
  }
}

</mosaic_0001>

<llo_original>
// kernel: tpu_custom_call.1
$region0: #{tpu_custom_call.1}
  #allocation0 [shape = 'u32[]', space=smem, size = 0x4, offset = 0x4, fixed_abs, tag = 'smem constant byte address 0x4 - core index']
  #allocation1 [shape = 'u32[72,128]{1,0:T(1,128)}', space=vmem, size = 0x9000, scoped, tag = 'internal scratch']
  #allocation2 [shape = 's32[1]{0}', space=sflag, size = 0x4, scoped, tag = 'scoped memory for tpu_custom_call.1']
  #allocation3 [shape = 'f32[1]{0:T(128)S(6)}', space=smem, size = 0x200, scoped, tag = 'prefetched SMEM operand 0']
  %s0 = inlined_call_operand.<no memory space> [shape: f32[1], index: 0, kind: input, shape index: {}]
  %s1 = inlined_call_operand.hbm [shape: f32[1,512], index: 1, kind: input, shape index: {}]
  %s2 = inlined_call_operand.hbm [shape: f32[1,512], index: 2, kind: output, shape index: {}]
  %s3 = sld [smem:[#allocation0]]
  $region18: #{tpu_custom_call.1} parent=0
    _
  %s5 = ssub.s32 1, %s3
  %s6 = scalar_select 0, %s5, %s3
  %7 = sst [smem:[#allocation3]] %s0
  $region1: #{tpu_custom_call.1} parent=0
    #allocation4 [shape = 'u8[2048]{0}', space=vmem, size = 0x800, scoped, tag = 'input window, operand 1, single buffered']
    #allocation5 [shape = 's32[1]{0}', space=sflag, size = 0x4, scoped, tag = 'scoped memory for tpu_custom_call.1']
    #allocation6 [shape = 's32[1]{0}', space=sflag, size = 0x4, scoped, tag = 'scoped memory for tpu_custom_call.1']
    #allocation7 [shape = 'u8[2048]{0}', space=vmem, size = 0x800, scoped, tag = 'output window, operand 0, single buffered']
    %8 = vsyncpa [#allocation5], 0
    %9 = vsyncpa [#allocation6], 0
    // Predicated region
    $region2: #{tpu_custom_call.1} parent=1 // pred_check
      _
    $region3: #{tpu_custom_call.1} parent=1 // pred_check_branch
      %11 = sbr.rel (0) target = $region5
    $region4: #{tpu_custom_call.1} parent=1 // pred_region
      %13 = vsyncadd [#allocation5], 0
      %s15 = sshll.u32 %s1, 4
      %s16 = int_to_ptr.hbm [resolvable:$true] %s15
      %s17 = sshll.u32 [#allocation4], 4
      %s18 = int_to_ptr.vmem [resolvable:$true] %s17
      %20 = dma.hbm_to_vmem [thread:$0]  %s16, 64, %s18, [#allocation5]
    $region5: #{tpu_custom_call.1} parent=1 // pred_fallthru
      _
    // Predicated region
    $region6: #{tpu_custom_call.1} parent=1 // pred_check
      _
    $region7: #{tpu_custom_call.1} parent=1 // pred_check_branch
      %22 = sbr.rel (0) target = $region9
    $region8: #{tpu_custom_call.1} parent=1 // pred_region
      %24 = dma.done [#allocation5], 64
    $region9: #{tpu_custom_call.1} parent=1 // pred_fallthru
      _
    %v25 = vld [vmem:[#allocation4] sm:$0xf]
    %s26 = sld [smem:[#allocation3]]
    %v27 = vstv %s26
    %v28 = vmul.f32 %v25, %v27
    %v29 = vlaneseq
    %vm30 = vcmp.ge.s32.totalorder %v29, 0
    %vm31 = vcmp.lt.s32.totalorder %v29, 512
    %vm32 = vmand %vm30, %vm31
    %33 = vst.msk [vmem:[#allocation7] sm:$0xf] %vm32, %v28
    // Predicated region
    $region10: #{tpu_custom_call.1} parent=1 // pred_check
      _
    $region11: #{tpu_custom_call.1} parent=1 // pred_check_branch
      %35 = sbr.rel (0) target = $region13
    $region12: #{tpu_custom_call.1} parent=1 // pred_region
      %37 = vsyncadd [#allocation6], 0
      %s39 = sshll.u32 [#allocation7], 4
      %s40 = int_to_ptr.vmem [resolvable:$true] %s39
      %s41 = sshll.u32 %s2, 4
      %s42 = int_to_ptr.hbm [resolvable:$true] %s41
      %44 = dma.vmem_to_hbm [thread:$0]  %s40, 64, %s42, [#allocation6]
    $region13: #{tpu_custom_call.1} parent=1 // pred_fallthru
      _
    // Predicated region
    $region14: #{tpu_custom_call.1} parent=1 // pred_check
      _
    $region15: #{tpu_custom_call.1} parent=1 // pred_check_branch
      %46 = sbr.rel (0) target = $region17
    $region16: #{tpu_custom_call.1} parent=1 // pred_region
      %48 = dma.done [#allocation6], 64
    $region17: #{tpu_custom_call.1} parent=1 // pred_fallthru
      _
    %49 = vsyncpa [#allocation5], 1
    %50 = vsyncpa [#allocation6], 1

</llo_original>
